<compile_context>
chip_gen: v7x
topology: tpu7x:2x2x1
jax: 0.10.0
libtpu: 0.0.40
codegen_flags: <defaults>
</compile_context>

<pallas_src>
import functools

import jax
import jax.numpy as jnp
from jax.experimental import pallas as pl
from jax.experimental.pallas import tpu as pltpu


_TILE_BYTES = 1 << 20                 # ~1 MiB of logits per tile in HBM
_VMEM_LIMIT = 32 * 1024 * 1024        # >= scoped default on v6e/v7x, raises v5e's 16 MiB


def _cdiv(a, b):
    return (a + b - 1) // b


def _round_up(x, m):
    return _cdiv(x, m) * m


def _round_down(x, m):
    return (x // m) * m


def _pick_row_tiling(n_rows, n_cols, itemsize, align):
    """Rows-per-tile and grid size for row tiles of a [n_rows, n_cols] array.

    Guarantees: block shapes satisfy the (8, 128) rule (multi-tile blocks are
    `align`-aligned; a single tile uses full extents), the grid has >= 2
    (prefer >= 4) steps when n_rows allows it (megacore + DMA/compute overlap),
    and padding waste is bounded by < 1 tile.
    """
    budget_rows = max(_TILE_BYTES // max(n_cols * itemsize, 1), align)
    max_rows = max(align, _round_down(budget_rows, align))
    if n_rows < 2 * align:
        return n_rows, 1                       # single full-extent tile
    min_tiles = 4 if n_rows >= 4 * align else 2
    n_tiles = max(min_tiles, _cdiv(n_rows, max_rows))
    tn = min(_round_up(_cdiv(n_rows, n_tiles), align), max_rows)
    return tn, _cdiv(n_rows, tn)


def _soft_targets_f32(t, shape, class_axis, num_classes):
    """_convert_target: soft one-hot targets from a class iota; VALU-lean."""
    C = num_classes
    t = jnp.clip(t, 0, C - 1)
    if C == 1:
        return jnp.ones(shape, jnp.float32)    # 0.9 + 0.05 + 0.05
    cls = jax.lax.broadcasted_iota(jnp.int32, shape, class_axis)
    m = (cls == t).astype(jnp.float32)
    if C == 2:
        # one_hot(t) and one_hot(1 - t) partition {0, 1}: y = 0.95*m + 0.05*(1 - m)
        return 0.9 * m + 0.05
    t0 = jnp.maximum(t - 1, 0)
    t1 = jnp.minimum(t + 1, C - 1)
    # t0 != t1 for every t when C >= 3, so the two 0.05 one-hots are disjoint:
    m01 = jnp.logical_or(cls == t0, cls == t1).astype(jnp.float32)
    return 0.9 * m + 0.05 * m01


def _poly1_focal_from_xy(x, y, *, epsilon, alpha, gamma):
    """Per-(sample, class) poly1-focal term; x, y are f32 arrays of equal shape."""
    # sigmoid via tanh: one EUP op instead of exp + reciprocal.
    p = 0.5 * jnp.tanh(0.5 * x) + 0.5
    q = 1.0 - p
    # Stable BCE-with-logits; log term reuses the sigmoid:
    #   log1p(exp(-|x|)) == -log(max(p, 1 - p))
    ce = jnp.maximum(x, 0.0) - x * y - jnp.log(jnp.maximum(p, q))

    pt = (p - q) * y + q                      # == y*p + (1-y)*(1-p)
    omp = 1.0 - pt

    g = float(gamma)
    if g.is_integer() and 0.0 <= g <= 8.0:
        gi = int(g)                           # default 2.0 -> VPU multiplies, no EUP pow
        if gi == 0:
            pg = jnp.ones_like(omp)
        else:
            pg = omp
            for _ in range(gi - 1):
                pg = pg * omp
    else:
        pg = jnp.power(omp, jnp.float32(g))

    # poly1 = alpha_t*ce*pg + eps*pg*omp == pg * (alpha_t*ce + eps*omp)
    if alpha >= 0:
        alpha_t = (2.0 * alpha - 1.0) * y + (1.0 - alpha)
        inner = alpha_t * ce + epsilon * omp
    else:
        inner = ce + epsilon * omp
    return pg * inner


def _poly1_kernel_small_c(labels_ref, logits_ref, out_ref, *,
                          num_classes, epsilon, alpha, gamma):
    # C < 128: transpose the row tile in-kernel so SAMPLES sit on the 128 lanes.
    x = jnp.transpose(logits_ref[...].astype(jnp.float32), (1, 0))   # (C, tn)
    t = labels_ref[...].astype(jnp.int32)                            # (1, tn)
    y = _soft_targets_f32(t, x.shape, class_axis=0, num_classes=num_classes)
    poly1 = _poly1_focal_from_xy(x, y, epsilon=epsilon, alpha=alpha, gamma=gamma)
    # Class (sublane) reduction -> lane-dense per-sample f32 loss row.
    out_ref[...] = jnp.sum(poly1, axis=0, keepdims=True).astype(out_ref.dtype)


def _poly1_kernel_large_c(labels_ref, logits_ref, out_ref, *,
                          num_classes, epsilon, alpha, gamma):
    # C >= 128: classes already fill the lane axis; no transpose needed.
    x = logits_ref[...].astype(jnp.float32)                          # (tn, C)
    t = labels_ref[...].astype(jnp.int32)                            # (tn, 1)
    y = _soft_targets_f32(t, x.shape, class_axis=1, num_classes=num_classes)
    poly1 = _poly1_focal_from_xy(x, y, epsilon=epsilon, alpha=alpha, gamma=gamma)
    out_ref[...] = jnp.sum(poly1, axis=1, keepdims=True).astype(out_ref.dtype)


def poly1_focal_loss(logits, labels, *, num_classes, epsilon=1.0, alpha=0.25,
                     gamma=2.0, reduction="none"):
    """logits: [N, C] float (f32 or bf16); labels: [N] int class ids.

    Matches Poly1FocalLoss.forward with label_is_onehot=False (weight/pos_weight
    unset).  Math is done in f32; the result is cast back to logits.dtype.
    """
    N, C = logits.shape
    assert C == num_classes
    labels = labels.reshape(N).astype(jnp.int32)
    itemsize = jnp.dtype(logits.dtype).itemsize

    common = dict(num_classes=C, epsilon=float(epsilon), alpha=float(alpha),
                  gamma=float(gamma))
    cparams = pltpu.CompilerParams(dimension_semantics=("parallel",),
                                   vmem_limit_bytes=_VMEM_LIMIT)

    if C < 128:
        # Samples on lanes (in-kernel transpose); lane-dense labels + output rows.
        tn, grid_n = _pick_row_tiling(N, C, itemsize, align=128)
        n_out = tn * grid_n
        out = pl.pallas_call(
            functools.partial(_poly1_kernel_small_c, **common),
            out_shape=jax.ShapeDtypeStruct((1, n_out), jnp.float32),
            grid=(grid_n,),
            in_specs=[
                pl.BlockSpec((1, tn), lambda i: (0, i)),    # labels (lane-dense)
                pl.BlockSpec((tn, C), lambda i: (i, 0)),    # logits row tile
            ],
            out_specs=pl.BlockSpec((1, tn), lambda i: (0, i)),
            compiler_params=cparams,
        )(labels.reshape(1, N), logits)
        poly1 = out[0, :N]
    else:
        # Row-major math; classes already lane-dense.
        tn, grid_n = _pick_row_tiling(N, C, itemsize, align=8)
        n_out = tn * grid_n
        out = pl.pallas_call(
            functools.partial(_poly1_kernel_large_c, **common),
            out_shape=jax.ShapeDtypeStruct((n_out, 1), jnp.float32),
            grid=(grid_n,),
            in_specs=[
                pl.BlockSpec((tn, 1), lambda i: (i, 0)),    # labels
                pl.BlockSpec((tn, C), lambda i: (i, 0)),    # logits row tile
            ],
            out_specs=pl.BlockSpec((tn, 1), lambda i: (i, 0)),
            compiler_params=cparams,
        )(labels.reshape(N, 1), logits)
        poly1 = out[:N, 0]

    if reduction == "mean":
        poly1 = jnp.mean(poly1)
    elif reduction == "sum":
        poly1 = jnp.sum(poly1)
    return poly1.astype(logits.dtype)


def _reference_poly1_focal(logits, labels, *, num_classes, epsilon=1.0,
                           alpha=0.25, gamma=2.0, reduction="none"):
    """Pure-JAX reference mirroring the PyTorch forward."""
    C = num_classes
    t = jnp.clip(labels.astype(jnp.int32), 0, C - 1)
    if C == 2:
        y = 0.95 * jax.nn.one_hot(t, C) + 0.05 * jax.nn.one_hot(1 - t, C)
    else:
        y = (0.9 * jax.nn.one_hot(t, C)
             + 0.05 * jax.nn.one_hot(jnp.clip(t - 1, 0, C - 1), C)
             + 0.05 * jax.nn.one_hot(jnp.clip(t + 1, 0, C - 1), C))
    x = logits.astype(jnp.float32)
    y = y.astype(jnp.float32)
    p = jax.nn.sigmoid(x)
    ce = jnp.maximum(x, 0.0) - x * y + jnp.log1p(jnp.exp(-jnp.abs(x)))
    pt = y * p + (1 - y) * (1 - p)
    fl = ce * (1 - pt) ** gamma
    if alpha >= 0:
        alpha_t = alpha * y + (1 - alpha) * (1 - y)
        fl = alpha_t * fl
    poly1 = (fl + epsilon * (1 - pt) ** (gamma + 1)).sum(axis=-1)
    if reduction == "mean":
        poly1 = poly1.mean()
    elif reduction == "sum":
        poly1 = poly1.sum()
    return poly1


if __name__ == "__main__":
    key = jax.random.PRNGKey(0)
    k1, k2, k3, k4, k5, k6 = jax.random.split(key, 6)

    # 1) Small-C path, single tile: N=8 samples, C=16 classes.
    N, C = 8, 16
    logits = jax.random.normal(k1, (N, C), dtype=jnp.float32)
    labels = jax.random.randint(k2, (N,), 0, C, dtype=jnp.int32)
    out = jax.block_until_ready(
        poly1_focal_loss(logits, labels, num_classes=C,
                         epsilon=1.0, alpha=0.25, gamma=2.0, reduction="none"))
    ref = _reference_poly1_focal(logits, labels, num_classes=C)
    assert out.shape == (N,)
    assert jnp.allclose(out, ref, atol=1e-4, rtol=1e-4), (out, ref)

    # 2) Large-C path (C>=128), N not a multiple of 8, mean reduction.
    N2, C2 = 12, 160
    logits2 = jax.random.normal(k3, (N2, C2), dtype=jnp.float32)
    labels2 = jax.random.randint(k4, (N2,), 0, C2, dtype=jnp.int32)
    out2 = jax.block_until_ready(
        poly1_focal_loss(logits2, labels2, num_classes=C2, reduction="mean"))
    ref2 = _reference_poly1_focal(logits2, labels2, num_classes=C2, reduction="mean")
    assert jnp.allclose(out2, ref2, atol=1e-4, rtol=1e-4), (out2, ref2)

    # 3) Small-C path, multi-tile grid with a partial edge tile (N=384 -> 2 tiles
    #    of 256 rows; exercises Pallas edge-block handling without host-side pad).
    N3, C3 = 384, 16
    logits3 = jax.random.normal(k5, (N3, C3), dtype=jnp.float32)
    labels3 = jax.random.randint(k6, (N3,), 0, C3, dtype=jnp.int32)
    out3 = jax.block_until_ready(
        poly1_focal_loss(logits3, labels3, num_classes=C3, reduction="none"))
    ref3 = _reference_poly1_focal(logits3, labels3, num_classes=C3)
    assert out3.shape == (N3,)
    assert jnp.allclose(out3, ref3, atol=1e-4, rtol=1e-4), (out3, ref3)

    print("KERNEL_OK")
</pallas_src>

<mosaic_0001>
module attributes {stable_mosaic.version = 11 : i64} {
  func.func @_poly1_kernel_small_c(%arg0: i32, %arg1: memref<1x8xi32, #tpu.memory_space<vmem>>, %arg2: memref<8x16xf32, #tpu.memory_space<vmem>>, %arg3: memref<1x8xf32, #tpu.memory_space<vmem>>) attributes {dimension_semantics = [#tpu.dimension_semantics<parallel>], iteration_bounds = array<i64: 1>, scalar_prefetch = 0 : i64, scratch_operands = 0 : i64, tpu.core_type = #tpu.core_type<tc>, window_params = [{transform_indices = @transform_0, window_bounds = array<i64: 1, 8>}, {transform_indices = @transform_1, window_bounds = array<i64: 8, 16>}, {transform_indices = @transform_2, window_bounds = array<i64: 1, 8>}]} {
    %c0 = arith.constant 0 : index
    %c0_0 = arith.constant 0 : index
    %0 = vector.load %arg2[%c0, %c0_0] : memref<8x16xf32, #tpu.memory_space<vmem>>, vector<8x16xf32>
    %1 = tpu.transpose %0, [1, 0] : vector<8x16xf32> -> vector<16x8xf32>
    %c0_1 = arith.constant 0 : index
    %c0_2 = arith.constant 0 : index
    %2 = vector.load %arg1[%c0_1, %c0_2] : memref<1x8xi32, #tpu.memory_space<vmem>>, vector<1x8xi32>
    %c0_i32 = arith.constant 0 : i32
    %c15_i32 = arith.constant 15 : i32
    %3 = vector.broadcast %c0_i32 : i32 to vector<1x8xi32>
    %4 = arith.maxsi %3, %2 : vector<1x8xi32>
    %5 = vector.broadcast %c15_i32 : i32 to vector<1x8xi32>
    %6 = arith.minsi %5, %4 : vector<1x8xi32>
    %7 = tpu.iota {dimensions = array<i32: 0>} : vector<16x8xi32>
    %8 = vector.broadcast %6 : vector<1x8xi32> to vector<16x8xi32>
    %9 = arith.cmpi eq, %7, %8 : vector<16x8xi32>
    %10 = arith.extui %9 : vector<16x8xi1> to vector<16x8xi32>
    %11 = arith.sitofp %10 : vector<16x8xi32> to vector<16x8xf32>
    %c1_i32 = arith.constant 1 : i32
    %12 = vector.broadcast %c1_i32 : i32 to vector<1x8xi32>
    %13 = arith.subi %6, %12 : vector<1x8xi32>
    %c0_i32_3 = arith.constant 0 : i32
    %14 = vector.broadcast %c0_i32_3 : i32 to vector<1x8xi32>
    %15 = arith.maxsi %13, %14 : vector<1x8xi32>
    %c1_i32_4 = arith.constant 1 : i32
    %16 = vector.broadcast %c1_i32_4 : i32 to vector<1x8xi32>
    %17 = arith.addi %6, %16 : vector<1x8xi32>
    %c15_i32_5 = arith.constant 15 : i32
    %18 = vector.broadcast %c15_i32_5 : i32 to vector<1x8xi32>
    %19 = arith.minsi %17, %18 : vector<1x8xi32>
    %20 = vector.broadcast %15 : vector<1x8xi32> to vector<16x8xi32>
    %21 = arith.cmpi eq, %7, %20 : vector<16x8xi32>
    %22 = vector.broadcast %19 : vector<1x8xi32> to vector<16x8xi32>
    %23 = arith.cmpi eq, %7, %22 : vector<16x8xi32>
    %24 = arith.ori %21, %23 : vector<16x8xi1>
    %25 = arith.extui %24 : vector<16x8xi1> to vector<16x8xi32>
    %26 = arith.sitofp %25 : vector<16x8xi32> to vector<16x8xf32>
    %cst = arith.constant 0.899999976 : f32
    %27 = vector.broadcast %cst : f32 to vector<16x8xf32>
    %28 = arith.mulf %27, %11 : vector<16x8xf32>
    %cst_6 = arith.constant 5.000000e-02 : f32
    %29 = vector.broadcast %cst_6 : f32 to vector<16x8xf32>
    %30 = arith.mulf %29, %26 : vector<16x8xf32>
    %31 = arith.addf %28, %30 : vector<16x8xf32>
    %cst_7 = arith.constant 5.000000e-01 : f32
    %32 = vector.broadcast %cst_7 : f32 to vector<16x8xf32>
    %33 = arith.mulf %32, %1 : vector<16x8xf32>
    %34 = math.tanh %33 : vector<16x8xf32>
    %cst_8 = arith.constant 5.000000e-01 : f32
    %35 = vector.broadcast %cst_8 : f32 to vector<16x8xf32>
    %36 = arith.mulf %35, %34 : vector<16x8xf32>
    %cst_9 = arith.constant 5.000000e-01 : f32
    %37 = vector.broadcast %cst_9 : f32 to vector<16x8xf32>
    %38 = arith.addf %36, %37 : vector<16x8xf32>
    %cst_10 = arith.constant 1.000000e+00 : f32
    %39 = vector.broadcast %cst_10 : f32 to vector<16x8xf32>
    %40 = arith.subf %39, %38 : vector<16x8xf32>
    %cst_11 = arith.constant 0.000000e+00 : f32
    %41 = vector.broadcast %cst_11 : f32 to vector<16x8xf32>
    %42 = arith.maximumf %1, %41 : vector<16x8xf32>
    %43 = arith.mulf %1, %31 : vector<16x8xf32>
    %44 = arith.subf %42, %43 : vector<16x8xf32>
    %45 = arith.maximumf %38, %40 : vector<16x8xf32>
    %46 = math.log %45 : vector<16x8xf32>
    %47 = arith.subf %44, %46 : vector<16x8xf32>
    %48 = arith.subf %38, %40 : vector<16x8xf32>
    %49 = arith.mulf %48, %31 : vector<16x8xf32>
    %50 = arith.addf %49, %40 : vector<16x8xf32>
    %cst_12 = arith.constant 1.000000e+00 : f32
    %51 = vector.broadcast %cst_12 : f32 to vector<16x8xf32>
    %52 = arith.subf %51, %50 : vector<16x8xf32>
    %53 = arith.mulf %52, %52 : vector<16x8xf32>
    %cst_13 = arith.constant -5.000000e-01 : f32
    %54 = vector.broadcast %cst_13 : f32 to vector<16x8xf32>
    %55 = arith.mulf %54, %31 : vector<16x8xf32>
    %cst_14 = arith.constant 7.500000e-01 : f32
    %56 = vector.broadcast %cst_14 : f32 to vector<16x8xf32>
    %57 = arith.addf %55, %56 : vector<16x8xf32>
    %58 = arith.mulf %57, %47 : vector<16x8xf32>
    %cst_15 = arith.constant 1.000000e+00 : f32
    %59 = vector.broadcast %cst_15 : f32 to vector<16x8xf32>
    %60 = arith.mulf %59, %52 : vector<16x8xf32>
    %61 = arith.addf %58, %60 : vector<16x8xf32>
    %62 = arith.mulf %53, %61 : vector<16x8xf32>
    %cst_16 = arith.constant dense<0.000000e+00> : vector<8xf32>
    %63 = vector.multi_reduction <add>, %62, %cst_16 [0] : vector<16x8xf32> to vector<8xf32>
    %64 = vector.shape_cast %63 : vector<8xf32> to vector<1x8xf32>
    %c0_17 = arith.constant 0 : index
    %c0_18 = arith.constant 0 : index
    %65 = vector.load %arg3[%c0_17, %c0_18] : memref<1x8xf32, #tpu.memory_space<vmem>>, vector<1x8xf32>
    tpu.vector_store %arg3[%c0_17, %c0_18], %64 {strides = array<i32>} : memref<1x8xf32, #tpu.memory_space<vmem>>, vector<1x8xf32>,
    return
  }
  func.func @transform_0(%arg0: i32) -> (i32, i32) {
    %c0_i32 = arith.constant 0 : i32
    %c0_i32_0 = arith.constant 0 : i32
    return %c0_i32, %arg0 : i32, i32
  }
  func.func @transform_1(%arg0: i32) -> (i32, i32) {
    %c0_i32 = arith.constant 0 : i32
    %c0_i32_0 = arith.constant 0 : i32
    return %arg0, %c0_i32 : i32, i32
  }
  func.func @transform_2(%arg0: i32) -> (i32, i32) {
    %c0_i32 = arith.constant 0 : i32
    %c0_i32_0 = arith.constant 0 : i32
    return %c0_i32, %arg0 : i32, i32
  }
}

</mosaic_0001>

<llo_original>
// kernel: tpu_custom_call.1
$region0: #{tpu_custom_call.1}
  #allocation0 [shape = 'u32[]', space=smem, size = 0x4, offset = 0x4, fixed_abs, tag = 'smem constant byte address 0x4 - core index']
  #allocation1 [shape = 'u32[144,128]{1,0:T(1,128)}', space=vmem, size = 0x12000, scoped, tag = 'internal scratch']
  %s0 = inlined_call_operand.hbm [shape: s32[1,8], index: 0, kind: input, shape index: {}]
  %s1 = inlined_call_operand.hbm [shape: f32[8,16], index: 1, kind: input, shape index: {}]
  %s2 = inlined_call_operand.hbm [shape: f32[1,8], index: 2, kind: output, shape index: {}]
  %s3 = sld [smem:[#allocation0]]
  $region26: #{tpu_custom_call.1} parent=0
    _
  %s5 = ssub.s32 1, %s3
  %s6 = scalar_select 0, %s5, %s3
  $region1: #{tpu_custom_call.1} parent=0
    #allocation2 [shape = 'u8[512]{0}', space=vmem, size = 0x400, scoped, tag = 'input window, operand 0, single buffered']
    #allocation3 [shape = 's32[1]{0}', space=sflag, size = 0x4, scoped, tag = 'scoped memory for tpu_custom_call.1']
    #allocation4 [shape = 's32[1]{0}', space=sflag, size = 0x4, scoped, tag = 'scoped memory for tpu_custom_call.1']
    #allocation5 [shape = 'u8[4096]{0}', space=vmem, size = 0x1000, scoped, tag = 'input window, operand 1, single buffered']
    #allocation6 [shape = 's32[1]{0}', space=sflag, size = 0x4, scoped, tag = 'scoped memory for tpu_custom_call.1']
    #allocation7 [shape = 'u8[512]{0}', space=vmem, size = 0x400, scoped, tag = 'output window, operand 0, single buffered']
    %7 = vsyncpa [#allocation3], 0
    %8 = vsyncpa [#allocation6], 0
    %9 = vsyncpa [#allocation4], 0
    // Predicated region
    $region2: #{tpu_custom_call.1} parent=1 // pred_check
      _
    $region3: #{tpu_custom_call.1} parent=1 // pred_check_branch
      %11 = sbr.rel (0) target = $region5
    $region4: #{tpu_custom_call.1} parent=1 // pred_region
      %s13 = ssub.s32 16, 16
      %14 = vsyncadd [#allocation3], %s13
      %s16 = sshll.u32 [#allocation2], 4
      %s17 = int_to_ptr.vmem [resolvable:$true] %s16
      %19 = dma.hbm_to_vmem [thread:$0]  %s0, 16, %s17, [#allocation3]
    $region5: #{tpu_custom_call.1} parent=1 // pred_fallthru
      _
    // Predicated region
    $region6: #{tpu_custom_call.1} parent=1 // pred_check
      _
    $region7: #{tpu_custom_call.1} parent=1 // pred_check_branch
      %21 = sbr.rel (0) target = $region9
    $region8: #{tpu_custom_call.1} parent=1 // pred_region
      %s23 = ssub.s32 128, 128
      %24 = vsyncadd [#allocation6], %s23
      %s26 = sshll.u32 [#allocation5], 4
      %s27 = int_to_ptr.vmem [resolvable:$true] %s26
      %29 = dma.hbm_to_vmem [thread:$0]  %s1, 128, %s27, [#allocation6]
    $region9: #{tpu_custom_call.1} parent=1 // pred_fallthru
      _
    // Predicated region
    $region10: #{tpu_custom_call.1} parent=1 // pred_check
      _
    $region11: #{tpu_custom_call.1} parent=1 // pred_check_branch
      %31 = sbr.rel (0) target = $region13
    $region12: #{tpu_custom_call.1} parent=1 // pred_region
      %32 = dma.done [#allocation3], 16
    $region13: #{tpu_custom_call.1} parent=1 // pred_fallthru
      _
    // Predicated region
    $region14: #{tpu_custom_call.1} parent=1 // pred_check
      _
    $region15: #{tpu_custom_call.1} parent=1 // pred_check_branch
      %34 = sbr.rel (0) target = $region17
    $region16: #{tpu_custom_call.1} parent=1 // pred_region
      %35 = dma.done [#allocation6], 128
    $region17: #{tpu_custom_call.1} parent=1 // pred_fallthru
      _
    %v36 = vld [vmem:[#allocation5] sm:$0xff]
    %37 = vxpose.xlu0.b32.start [1/16] %v36, 128
    %38 = vxpose.xlu0.b32.cont [2/16] 0.0, 128
    %39 = vxpose.xlu0.b32.cont [3/16] 0.0, 128
    %40 = vxpose.xlu0.b32.cont [4/16] 0.0, 128
    %41 = vxpose.xlu0.b32.cont [5/16] 0.0, 128
    %42 = vxpose.xlu0.b32.cont [6/16] 0.0, 128
    %43 = vxpose.xlu0.b32.cont [7/16] 0.0, 128
    %44 = vxpose.xlu0.b32.cont [8/16] 0.0, 128
    %45 = vxpose.xlu0.b32.cont [9/16] 0.0, 128
    %46 = vxpose.xlu0.b32.cont [10/16] 0.0, 128
    %47 = vxpose.xlu0.b32.cont [11/16] 0.0, 128
    %48 = vxpose.xlu0.b32.cont [12/16] 0.0, 128
    %49 = vxpose.xlu0.b32.cont [13/16] 0.0, 128
    %50 = vxpose.xlu0.b32.cont [14/16] 0.0, 128
    %51 = vxpose.xlu0.b32.cont [15/16] 0.0, 128
    %52 = vxpose.xlu0.b32.end [16/16] 0.0, 128
    %v53 = vpop.trf.xlu0
    %v54 = vpop.trf.xlu0
    %v55 = vpop.trf.xlu0
    %v56 = vpop.trf.xlu0
    %v57 = vpop.trf.xlu0
    %v58 = vpop.trf.xlu0
    %v59 = vpop.trf.xlu0
    %v60 = vpop.trf.xlu0
    %v61 = vpop.trf.xlu0
    %v62 = vpop.trf.xlu0
    %v63 = vpop.trf.xlu0
    %v64 = vpop.trf.xlu0
    %v65 = vpop.trf.xlu0
    %v66 = vpop.trf.xlu0
    %v67 = vpop.trf.xlu0
    %v68 = vpop.trf.xlu0
    %v69 = vld [vmem:[#allocation2] sm:$0x1]
    %vm70 = vcmp.gt.s32.totalorder %v69, 0
    %v71 = vsel %vm70, %v69, 0
    %vm72 = vcmp.lt.s32.totalorder %v71, 15
    %v73 = vsel %vm72, %v71, 15
    %v74 = vlaneseq
    %v75 = vshrl.u32 %v74, 7
    %v76 = vadd.s32 %v75, 8
    %v77 = vlaneseq
    %v78 = vshrl.u32 %v77, 7
    %v79 = vsub.s32 0, %v78
    %v80 = vrot.slane %v73, %v79
    %vm81 = vcmp.eq.s32.totalorder %v75, %v80
    %vm82 = vcmp.eq.s32.totalorder %v76, %v80
    %v83 = vsel %vm81, 1, 0
    %v84 = vsel %vm82, 1, 0
    %v85 = vcvt.s32.f32 %v83
    %v86 = vcvt.s32.f32 %v84
    %v87 = vsub.s32 %v73, 1
    %vm88 = vcmp.gt.s32.totalorder %v87, 0
    %v89 = vsel %vm88, %v87, 0
    %v90 = vadd.s32 %v73, 1
    %vm91 = vcmp.lt.s32.totalorder %v90, 15
    %v92 = vsel %vm91, %v90, 15
    %v93 = vlaneseq
    %v94 = vshrl.u32 %v93, 7
    %v95 = vsub.s32 0, %v94
    %v96 = vrot.slane %v89, %v95
    %vm97 = vcmp.eq.s32.totalorder %v75, %v96
    %vm98 = vcmp.eq.s32.totalorder %v76, %v96
    %v99 = vlaneseq
    %v100 = vshrl.u32 %v99, 7
    %v101 = vsub.s32 0, %v100
    %v102 = vrot.slane %v92, %v101
    %vm103 = vcmp.eq.s32.totalorder %v75, %v102
    %vm104 = vcmp.eq.s32.totalorder %v76, %v102
    %vm105 = vmor %vm97, %vm103
    %vm106 = vmor %vm98, %vm104
    %v107 = vsel %vm105, 1, 0
    %v108 = vsel %vm106, 1, 0
    %v109 = vcvt.s32.f32 %v107
    %v110 = vcvt.s32.f32 %v108
    %v111 = vmul.f32 %v85, 0.9
    %v112 = vmul.f32 %v86, 0.9
    %v113 = vmul.f32 %v109, 0.05
    %v114 = vmul.f32 %v110, 0.05
    %v115 = vadd.f32 %v111, %v113
    %v116 = vadd.f32 %v112, %v114
    %v117 = vmul.f32 %v53, 0.5
    %v118 = vmul.f32 %v54, 0.5
    %v119 = vtanh.pop %v117
    %v120 = vtanh.pop %v118
    %v121 = vmul.f32 %v119, 0.5
    %v122 = vmul.f32 %v120, 0.5
    %v123 = vadd.f32 %v121, 0.5
    %v124 = vadd.f32 %v122, 0.5
    %v125 = vsub.f32 1.0, %v123
    %v126 = vsub.f32 1.0, %v124
    %v127 = vmax.f32 %v53, 0.0
    %v128 = vmax.f32 %v54, 0.0
    %v129 = vmul.f32 %v53, %v115
    %v130 = vmul.f32 %v54, %v116
    %v131 = vsub.f32 %v127, %v129
    %v132 = vsub.f32 %v128, %v130
    %v133 = vmax.f32 %v123, %v125
    %v134 = vmax.f32 %v124, %v126
    %v135 = vlog2.pop %v133
    %v136 = vmul.f32 %v135, 0.6931472
    %v137 = vlog2.pop %v134
    %v138 = vmul.f32 %v137, 0.6931472
    %v139 = vsub.f32 %v131, %v136
    %v140 = vsub.f32 %v132, %v138
    %v141 = vsub.f32 %v123, %v125
    %v142 = vsub.f32 %v124, %v126
    %v143 = vmul.f32 %v141, %v115
    %v144 = vmul.f32 %v142, %v116
    %v145 = vadd.f32 %v143, %v125
    %v146 = vadd.f32 %v144, %v126
    %v147 = vsub.f32 1.0, %v145
    %v148 = vsub.f32 1.0, %v146
    %v149 = vmul.f32 %v147, %v147
    %v150 = vmul.f32 %v148, %v148
    %v151 = vmul.f32 %v115, -0.5
    %v152 = vmul.f32 %v116, -0.5
    %v153 = vadd.f32 %v151, 0.75
    %v154 = vadd.f32 %v152, 0.75
    %v155 = vmul.f32 %v153, %v139
    %v156 = vmul.f32 %v154, %v140
    %v157 = vadd.f32 %v155, %v147
    %v158 = vadd.f32 %v156, %v148
    %v159 = vmul.f32 %v149, %v157
    %v160 = vmul.f32 %v150, %v158
    %vm161 = vcmask 64512
    %v162 = vsel %vm161, %v159, 0.0
    %v163 = vsel %vm161, %v160, 0.0
    %v164 = vadd.f32 %v162, %v163
    %v165 = vrot.slane %v164, 4
    %v166 = vadd.f32 %v164, %v165
    %v167 = vrot.slane %v166, 2
    %v168 = vadd.f32 %v166, %v167
    %v169 = vrot.slane %v168, 1
    %v170 = vadd.f32 %v168, %v169
    %vm171 = vcmask 57344
    %172 = vst.msk [vmem:[#allocation7] sm:$0x1] %vm171, %v170
    // Predicated region
    $region18: #{tpu_custom_call.1} parent=1 // pred_check
      _
    $region19: #{tpu_custom_call.1} parent=1 // pred_check_branch
      %174 = sbr.rel (0) target = $region21
    $region20: #{tpu_custom_call.1} parent=1 // pred_region
      %s176 = ssub.s32 16, 16
      %177 = vsyncadd [#allocation4], %s176
      %s179 = sshll.u32 [#allocation7], 4
      %s180 = int_to_ptr.vmem [resolvable:$true] %s179
      %182 = dma.vmem_to_hbm [thread:$0]  %s180, 16, %s2, [#allocation4]
    $region21: #{tpu_custom_call.1} parent=1 // pred_fallthru
      _
    // Predicated region
    $region22: #{tpu_custom_call.1} parent=1 // pred_check
      _
    $region23: #{tpu_custom_call.1} parent=1 // pred_check_branch
      %184 = sbr.rel (0) target = $region25
    $region24: #{tpu_custom_call.1} parent=1 // pred_region
      %185 = dma.done [#allocation4], 16
    $region25: #{tpu_custom_call.1} parent=1 // pred_fallthru
      _
    %186 = vsyncpa [#allocation3], 1
    %187 = vsyncpa [#allocation6], 1
    %188 = vsyncpa [#allocation4], 1

</llo_original>
